<compile_context>
chip_gen: v5e
topology: v5e:2x2
jax: 0.10.0
libtpu: 0.0.40
codegen_flags: <defaults>
</compile_context>

<pallas_src>
import jax
import jax.numpy as jnp
from jax.experimental import pallas as pl
from jax.experimental.pallas import tpu as pltpu

DIM = 4               # dim_ in the PyTorch module
SCALE_A = 1.877537
SCALE_B = 4.92487
OUT_MUL = 8.0
OUT_ADD = 1.0
_LANE = 128


def _pc_regressor_kernel(x_ref, w_ref, b_ref, o_ref):
    # x_ref: (DIM, tb) VMEM tile — batch on the 128-lane axis
    # w_ref: (DIM,)    SMEM scalars (transposed Linear weight)
    # b_ref: (1,)      SMEM scalar (bias)
    # o_ref: (1, tb)   VMEM lane-dense output tile
    z = x_ref[0:1, :] * w_ref[0]
    for d in range(1, DIM):
        z = z + x_ref[d:d + 1, :] * w_ref[d]
    z = z + b_ref[0]
    # Sigmoid(z * 1.877537 + 4.92487) * 8.0 + 1.0  (exp goes to the EUP slot)
    o_ref[...] = jax.nn.sigmoid(z * SCALE_A + SCALE_B) * OUT_MUL + OUT_ADD


def _round_up(n, m):
    return ((n + m - 1) // m) * m


def pc_regressor_forward(x, weight, bias, *, block_batch=8192):
    """x: (B, DIM) f32; weight: (1, DIM) (PyTorch nn.Linear layout); bias: (1,)."""
    B, D = x.shape
    assert D == DIM
    assert block_batch % _LANE == 0

    # Batch tile: as large as requested, but never bigger than the 128-padded batch.
    tb = min(block_batch, _round_up(B, _LANE))
    b_padded = _round_up(B, tb)

    # Put batch on the lane axis; pad ragged batches (padded rows are sliced off below).
    x_t = jnp.transpose(x.astype(jnp.float32))               # (DIM, B)
    if b_padded != B:
        x_t = jnp.pad(x_t, ((0, 0), (0, b_padded - B)))

    w_flat = weight.reshape(DIM).astype(jnp.float32)          # (DIM,) -> SMEM scalars
    b_flat = bias.reshape(1).astype(jnp.float32)              # (1,)   -> SMEM scalar

    grid = (b_padded // tb,)

    out = pl.pallas_call(
        _pc_regressor_kernel,
        out_shape=jax.ShapeDtypeStruct((1, b_padded), jnp.float32),
        grid_spec=pltpu.PrefetchScalarGridSpec(
            num_scalar_prefetch=0,
            grid=grid,
            in_specs=[
                pl.BlockSpec((DIM, tb), lambda i: (0, i)),           # x tile (lane-dense)
                pl.BlockSpec(memory_space=pltpu.MemorySpace.SMEM),   # weight scalars
                pl.BlockSpec(memory_space=pltpu.MemorySpace.SMEM),   # bias scalar
            ],
            out_specs=pl.BlockSpec((1, tb), lambda i: (0, i)),       # lane-dense output
        ),
        compiler_params=pltpu.CompilerParams(
            dimension_semantics=("parallel",),
        ),
    )(x_t, w_flat, b_flat)

    # (1, b_padded) -> (b_padded, 1) is a free row-major view; drop padded rows.
    return out.reshape(b_padded, 1)[:B]


def pc_regressor_reference(x, weight, bias):
    z = x @ weight.T + bias
    return jax.nn.sigmoid(z * SCALE_A + SCALE_B) * OUT_MUL + OUT_ADD


if __name__ == "__main__":
    key = jax.random.PRNGKey(0)
    kx, kw, kb, kx2 = jax.random.split(key, 4)

    # Deterministic parameter init mimicking nn.Linear default: U(-1/sqrt(DIM), 1/sqrt(DIM))
    bound = 1.0 / jnp.sqrt(jnp.float32(DIM))
    weight = jax.random.uniform(kw, (1, DIM), jnp.float32, -bound, bound)
    bias = jax.random.uniform(kb, (1,), jnp.float32, -bound, bound)

    # Small batch, lane-aligned.
    B = 128
    x = jax.random.normal(kx, (B, DIM), jnp.float32)
    out = jax.block_until_ready(pc_regressor_forward(x, weight, bias))
    ref = pc_regressor_reference(x, weight, bias)
    assert out.shape == (B, 1)
    assert jnp.allclose(out, ref, atol=1e-5, rtol=1e-5), "mismatch vs reference (B=128)"

    # Ragged batch (exercises the padding / tail handling path).
    B2 = 37
    x2 = jax.random.normal(kx2, (B2, DIM), jnp.float32)
    out2 = jax.block_until_ready(pc_regressor_forward(x2, weight, bias))
    ref2 = pc_regressor_reference(x2, weight, bias)
    assert out2.shape == (B2, 1)
    assert jnp.allclose(out2, ref2, atol=1e-5, rtol=1e-5), "mismatch vs reference (B=37)"

    print("KERNEL_OK")
</pallas_src>

<mosaic_0001>
module attributes {stable_mosaic.version = 11 : i64} {
  func.func @_pc_regressor_kernel(%arg0: i32, %arg1: memref<4x128xf32, #tpu.memory_space<vmem>>, %arg2: memref<4xf32, #tpu.memory_space<smem>>, %arg3: memref<1xf32, #tpu.memory_space<smem>>, %arg4: memref<1x128xf32, #tpu.memory_space<vmem>>) attributes {dimension_semantics = [#tpu.dimension_semantics<parallel>], iteration_bounds = array<i64: 1>, scalar_prefetch = 0 : i64, scratch_operands = 0 : i64, tpu.core_type = #tpu.core_type<tc>, window_params = [{transform_indices = @transform_0, window_bounds = array<i64: 4, 128>}, {transform_indices = @transform_1, window_bounds = array<i64: 4>}, {transform_indices = @transform_2, window_bounds = array<i64: 1>}, {transform_indices = @transform_3, window_bounds = array<i64: 1, 128>}]} {
    %c0 = arith.constant 0 : index
    %c0_0 = arith.constant 0 : index
    %0 = vector.load %arg1[%c0, %c0_0] : memref<4x128xf32, #tpu.memory_space<vmem>>, vector<1x128xf32>
    %c0_1 = arith.constant 0 : index
    %1 = memref.load %arg2[%c0_1] : memref<4xf32, #tpu.memory_space<smem>>
    %2 = vector.broadcast %1 : f32 to vector<1x128xf32>
    %3 = arith.mulf %0, %2 : vector<1x128xf32>
    %c1 = arith.constant 1 : index
    %c0_2 = arith.constant 0 : index
    %4 = vector.load %arg1[%c1, %c0_2] : memref<4x128xf32, #tpu.memory_space<vmem>>, vector<1x128xf32>
    %c1_3 = arith.constant 1 : index
    %5 = memref.load %arg2[%c1_3] : memref<4xf32, #tpu.memory_space<smem>>
    %6 = vector.broadcast %5 : f32 to vector<1x128xf32>
    %7 = arith.mulf %4, %6 : vector<1x128xf32>
    %8 = arith.addf %3, %7 : vector<1x128xf32>
    %c2 = arith.constant 2 : index
    %c0_4 = arith.constant 0 : index
    %9 = vector.load %arg1[%c2, %c0_4] : memref<4x128xf32, #tpu.memory_space<vmem>>, vector<1x128xf32>
    %c2_5 = arith.constant 2 : index
    %10 = memref.load %arg2[%c2_5] : memref<4xf32, #tpu.memory_space<smem>>
    %11 = vector.broadcast %10 : f32 to vector<1x128xf32>
    %12 = arith.mulf %9, %11 : vector<1x128xf32>
    %13 = arith.addf %8, %12 : vector<1x128xf32>
    %c3 = arith.constant 3 : index
    %c0_6 = arith.constant 0 : index
    %14 = vector.load %arg1[%c3, %c0_6] : memref<4x128xf32, #tpu.memory_space<vmem>>, vector<1x128xf32>
    %c3_7 = arith.constant 3 : index
    %15 = memref.load %arg2[%c3_7] : memref<4xf32, #tpu.memory_space<smem>>
    %16 = vector.broadcast %15 : f32 to vector<1x128xf32>
    %17 = arith.mulf %14, %16 : vector<1x128xf32>
    %18 = arith.addf %13, %17 : vector<1x128xf32>
    %c0_8 = arith.constant 0 : index
    %19 = memref.load %arg3[%c0_8] : memref<1xf32, #tpu.memory_space<smem>>
    %20 = vector.broadcast %19 : f32 to vector<1x128xf32>
    %21 = arith.addf %18, %20 : vector<1x128xf32>
    %cst = arith.constant 1.87753701 : f32
    %22 = vector.broadcast %cst : f32 to vector<1x128xf32>
    %23 = arith.mulf %21, %22 : vector<1x128xf32>
    %cst_9 = arith.constant 4.924870e+00 : f32
    %24 = vector.broadcast %cst_9 : f32 to vector<1x128xf32>
    %25 = arith.addf %23, %24 : vector<1x128xf32>
    %26 = arith.negf %25 : vector<1x128xf32>
    %27 = math.exp %26 : vector<1x128xf32>
    %cst_10 = arith.constant 1.000000e+00 : f32
    %28 = vector.broadcast %cst_10 : f32 to vector<1x128xf32>
    %29 = arith.addf %28, %27 : vector<1x128xf32>
    %30 = arith.divf %28, %29 : vector<1x128xf32>
    %cst_11 = arith.constant 8.000000e+00 : f32
    %31 = vector.broadcast %cst_11 : f32 to vector<1x128xf32>
    %32 = arith.mulf %30, %31 : vector<1x128xf32>
    %cst_12 = arith.constant 1.000000e+00 : f32
    %33 = vector.broadcast %cst_12 : f32 to vector<1x128xf32>
    %34 = arith.addf %32, %33 : vector<1x128xf32>
    %c0_13 = arith.constant 0 : index
    %c0_14 = arith.constant 0 : index
    %35 = vector.load %arg4[%c0_13, %c0_14] : memref<1x128xf32, #tpu.memory_space<vmem>>, vector<1x128xf32>
    tpu.vector_store %arg4[%c0_13, %c0_14], %34 {strides = array<i32>} : memref<1x128xf32, #tpu.memory_space<vmem>>, vector<1x128xf32>,
    return
  }
  func.func @transform_0(%arg0: i32) -> (i32, i32) {
    %c0_i32 = arith.constant 0 : i32
    %c0_i32_0 = arith.constant 0 : i32
    return %c0_i32, %arg0 : i32, i32
  }
  func.func @transform_1(%arg0: i32) -> i32 {
    %c0_i32 = arith.constant 0 : i32
    %c0_i32_0 = arith.constant 0 : i32
    return %c0_i32 : i32
  }
  func.func @transform_2(%arg0: i32) -> i32 {
    %c0_i32 = arith.constant 0 : i32
    %c0_i32_0 = arith.constant 0 : i32
    return %c0_i32 : i32
  }
  func.func @transform_3(%arg0: i32) -> (i32, i32) {
    %c0_i32 = arith.constant 0 : i32
    %c0_i32_0 = arith.constant 0 : i32
    return %c0_i32, %arg0 : i32, i32
  }
}

</mosaic_0001>

<llo_original>
// kernel: tpu_custom_call.1
$region0: #{tpu_custom_call.1}
  #allocation0 [shape = 'u32[]', space=smem, size = 0x4, offset = 0x4, fixed_abs, tag = 'smem constant byte address 0x4 - core index']
  #allocation1 [shape = 'u32[72,128]{1,0:T(1,128)}', space=vmem, size = 0x9000, scoped, tag = 'internal scratch']
  #allocation2 [shape = 'f32[1]{0:T(128)S(6)}', space=smem, size = 0x200, scoped, tag = 'scoped memory for tpu_custom_call.1']
  %s0 = inlined_call_operand.hbm [shape: f32[4,128], index: 0, kind: input, shape index: {}]
  %s1 = inlined_call_operand.vmem [shape: f32[4], index: 1, kind: input, shape index: {}]
  %s2 = inlined_call_operand.<no memory space> [shape: f32[1], index: 2, kind: input, shape index: {}]
  %s3 = inlined_call_operand.hbm [shape: f32[1,128], index: 3, kind: output, shape index: {}]
  %s4 = sld [smem:[#allocation0]]
  $region30: #{tpu_custom_call.1} parent=0
    _
  %s6 = ssub.s32 1, %s4
  %s7 = scalar_select 0, %s6, %s4
  %8 = sst [smem:[#allocation2]] %s2
  $region1: #{tpu_custom_call.1} parent=0
    #allocation3 [shape = 'u8[2048]{0}', space=vmem, size = 0x800, scoped, tag = 'input window, operand 0, single buffered']
    #allocation4 [shape = 's32[1]{0}', space=sflag, size = 0x4, scoped, tag = 'scoped memory for tpu_custom_call.1']
    #allocation5 [shape = 's32[1]{0}', space=sflag, size = 0x4, scoped, tag = 'scoped memory for tpu_custom_call.1']
    #allocation6 [shape = 's32[1]{0}', space=sflag, size = 0x4, scoped, tag = 'scoped memory for tpu_custom_call.1']
    #allocation7 [shape = 'u8[512]{0}', space=smem, size = 0x200, scoped, tag = 'input window, operand 1, single buffered']
    #allocation8 [shape = 'u8[512]{0}', space=vmem, size = 0x400, scoped, tag = 'output window, operand 0, single buffered']
    %9 = vsyncpa [#allocation4], 0
    %10 = vsyncpa [#allocation6], 0
    %11 = vsyncpa [#allocation5], 0
    // Predicated region
    $region2: #{tpu_custom_call.1} parent=1 // pred_check
      _
    $region3: #{tpu_custom_call.1} parent=1 // pred_check_branch
      %13 = sbr.rel (0) target = $region5
    $region4: #{tpu_custom_call.1} parent=1 // pred_region
      %15 = vsyncadd [#allocation4], 0
      %s17 = sshll.u32 %s0, 4
      %s18 = int_to_ptr.hbm [resolvable:$true] %s17
      %s19 = sshll.u32 [#allocation3], 4
      %s20 = int_to_ptr.vmem [resolvable:$true] %s19
      %22 = dma.hbm_to_vmem [thread:$0]  %s18, 64, %s20, [#allocation4]
    $region5: #{tpu_custom_call.1} parent=1 // pred_fallthru
      _
    // Predicated region
    $region6: #{tpu_custom_call.1} parent=1 // pred_check
      _
    $region7: #{tpu_custom_call.1} parent=1 // pred_check_branch
      %24 = sbr.rel (0) target = $region9
    $region8: #{tpu_custom_call.1} parent=1 // pred_region
      %26 = vsyncadd [#allocation6], 0
      %s28 = sshll.u32 %s1, 4
      %s29 = int_to_ptr.vmem [resolvable:$true] %s28
      %31 = dma.vmem_to_smem %s29, 16, [#allocation7], [#allocation6]
    $region9: #{tpu_custom_call.1} parent=1 // pred_fallthru
      _
    // Predicated region
    $region10: #{tpu_custom_call.1} parent=1 // pred_check
      _
    $region11: #{tpu_custom_call.1} parent=1 // pred_check_branch
      %33 = sbr.rel (0) target = $region13
    $region12: #{tpu_custom_call.1} parent=1 // pred_region
      _
    $region13: #{tpu_custom_call.1} parent=1 // pred_fallthru
      _
    // Predicated region
    $region14: #{tpu_custom_call.1} parent=1 // pred_check
      _
    $region15: #{tpu_custom_call.1} parent=1 // pred_check_branch
      %35 = sbr.rel (0) target = $region17
    $region16: #{tpu_custom_call.1} parent=1 // pred_region
      %37 = dma.done [#allocation4], 64
    $region17: #{tpu_custom_call.1} parent=1 // pred_fallthru
      _
    // Predicated region
    $region18: #{tpu_custom_call.1} parent=1 // pred_check
      _
    $region19: #{tpu_custom_call.1} parent=1 // pred_check_branch
      %39 = sbr.rel (0) target = $region21
    $region20: #{tpu_custom_call.1} parent=1 // pred_region
      %41 = dma.done [#allocation6], 16
    $region21: #{tpu_custom_call.1} parent=1 // pred_fallthru
      _
    %42 = sfence
    %v43 = vld [vmem:[#allocation3] sm:$0x1]
    %s44 = sld [smem:[#allocation7]]
    %v45 = vstv %s44
    %v46 = vmul.f32 %v43, %v45
    %v47 = vld [vmem:[#allocation3 + $0x1] sm:$0x1]
    %s48 = sld [smem:[#allocation7 + $0x1]]
    %v49 = vstv %s48
    %v50 = vmul.f32 %v47, %v49
    %v51 = vadd.f32 %v46, %v50
    %v52 = vld [vmem:[#allocation3 + $0x2] sm:$0x1]
    %s53 = sld [smem:[#allocation7 + $0x2]]
    %v54 = vstv %s53
    %v55 = vmul.f32 %v52, %v54
    %v56 = vadd.f32 %v51, %v55
    %v57 = vld [vmem:[#allocation3 + $0x3] sm:$0x1]
    %s58 = sld [smem:[#allocation7 + $0x3]]
    %v59 = vstv %s58
    %v60 = vmul.f32 %v57, %v59
    %v61 = vadd.f32 %v56, %v60
    %s62 = sld [smem:[#allocation2]]
    %v63 = vstv %s62
    %v64 = vadd.f32 %v61, %v63
    %v65 = vmul.f32 %v64, 1.877537
    %v66 = vadd.f32 %v65, 4.92487
    %v67 = vxor.u32 %v66, 2147483648
    %v68 = vmul.f32 %v67, 1.442695
    %v69 = vpow.pop %v68
    %v70 = vadd.f32 %v69, 1.0
    %v71 = vrcp.pop %v70
    %v72 = vmul.f32 %v70, %v71
    %v73 = vsub.f32 1.0, %v72
    %v74 = vmul.f32 %v71, %v73
    %v75 = vadd.f32 %v71, %v74
    %vm76 = vweird.f32 %v70
    %vm77 = vweird.f32 %v71
    %vm78 = vmor %vm76, %vm77
    %v79 = vsel %vm78, %v71, %v75
    %v80 = vand.u32 2147483647, %v70
    %vm81 = vcmp.eq.f32.partialorder %v80, 8.507059e+37
    %v82 = vand.u32 %v70, 2147483648
    %v83 = vor.u32 1.1754944e-38, %v82
    %v84 = vsel %vm81, %v83, %v79
    %v85 = vmul.f32 1.0, %v84
    %v86 = vmul.f32 %v85, 8.0
    %v87 = vadd.f32 %v86, 1.0
    %88 = vst [vmem:[#allocation8] sm:$0x1] %v87
    // Predicated region
    $region22: #{tpu_custom_call.1} parent=1 // pred_check
      _
    $region23: #{tpu_custom_call.1} parent=1 // pred_check_branch
      %90 = sbr.rel (0) target = $region25
    $region24: #{tpu_custom_call.1} parent=1 // pred_region
      %92 = vsyncadd [#allocation5], 0
      %s94 = sshll.u32 [#allocation8], 4
      %s95 = int_to_ptr.vmem [resolvable:$true] %s94
      %s96 = sshll.u32 %s3, 4
      %s97 = int_to_ptr.hbm [resolvable:$true] %s96
      %99 = dma.vmem_to_hbm [thread:$0]  %s95, 16, %s97, [#allocation5]
    $region25: #{tpu_custom_call.1} parent=1 // pred_fallthru
      _
    // Predicated region
    $region26: #{tpu_custom_call.1} parent=1 // pred_check
      _
    $region27: #{tpu_custom_call.1} parent=1 // pred_check_branch
      %101 = sbr.rel (0) target = $region29
    $region28: #{tpu_custom_call.1} parent=1 // pred_region
      %103 = dma.done [#allocation5], 16
    $region29: #{tpu_custom_call.1} parent=1 // pred_fallthru
      _
    %104 = vsyncpa [#allocation4], 1
    %105 = vsyncpa [#allocation5], 1
    %106 = vsyncpa [#allocation6], 1

</llo_original>
